<compile_context>
chip_gen: v7x
topology: tpu7x:2x2x1
jax: 0.10.0
libtpu: 0.0.40
codegen_flags: <defaults>
</compile_context>

<pallas_src>
import jax
import jax.numpy as jnp
from jax.experimental import pallas as pl
from jax.experimental.pallas import tpu as pltpu


def _round_up(x, m):
    return ((x + m - 1) // m) * m


def _mlp_kernel(x_ref, w1_ref, b1_ref, w2_ref, b2_ref, o_ref):
    # f32 tile read from HBM, cast to bf16 on the VPU (idle slots), MXU matmul
    # with f32 accumulation.
    x = x_ref[...].astype(jnp.bfloat16)
    h = jnp.dot(x, w1_ref[...], preferred_element_type=jnp.float32)
    h = jnp.maximum(h + b1_ref[...], 0.0)            # bias + ReLU in f32 (VPU)
    # Dropout == identity (eval mode).
    out = jnp.dot(h.astype(jnp.bfloat16), w2_ref[...],
                  preferred_element_type=jnp.float32)
    o_ref[...] = (out + b2_ref[...]).astype(o_ref.dtype)


def prepare_params(w1, b1, w2, b2):
    """One-time weight preparation (do NOT call per forward).

    Pads the hidden dim to a multiple of 128 (zero columns/rows are
    mathematically inert through ReLU and the second matmul) and casts the
    matmul operands to bf16.  Biases stay f32.
    Shapes in : w1 (F,H), b1 (1,H), w2 (H,O), b2 (1,O)   [w = PyTorch weight.T]
    Shapes out: w1 (F,Hp) bf16, b1 (1,Hp) f32, w2 (Hp,O) bf16, b2 (1,O) f32
    """
    F, H = w1.shape
    O = w2.shape[1]
    # NOTE: 128 granularity is ideal for the v5e MXU; on v6e/v7x (256x256 MXU)
    # a 256-multiple hidden dim helps only once the kernel is compute-bound.
    H_p = _round_up(H, 128)
    w1p = jnp.zeros((F, H_p), jnp.bfloat16).at[:, :H].set(w1.astype(jnp.bfloat16))
    b1p = jnp.zeros((1, H_p), jnp.float32).at[:, :H].set(b1.astype(jnp.float32))
    w2p = jnp.zeros((H_p, O), jnp.bfloat16).at[:H, :].set(w2.astype(jnp.bfloat16))
    b2p = b2.astype(jnp.float32).reshape(1, O)
    return w1p, b1p, w2p, b2p


def _pick_tb(B, block_b):
    """Batch tile: big (amortize ~0.35us/step), multiple of 8, bounded waste,
    and >=2 grid steps when the batch is large enough (v7x has 2 TCs/chip)."""
    b8 = _round_up(max(B, 8), 8)
    tb = min(_round_up(block_b, 8), b8)
    if B >= 256 and -(-B // tb) < 2:            # give both TensorCores work
        tb = _round_up(-(-B // 2), 8)
    # Bound last-tile padding waste to ~12.5% of B for awkward batch sizes.
    while tb > 128 and (-(-B // tb) * tb - B) * 8 > B:
        tb = _round_up(tb // 2, 8)
    return max(tb, 8)


def mlp_forward(x, params, *, block_b=512, force_pallas=False):
    """Fused 2-layer MLP forward.

    x      : (B, F) float32
    params : output of prepare_params() (padded bf16 weights, f32 biases)
    returns: (B, O) float32
    """
    w1, b1, w2, b2 = params
    B, F = x.shape
    H_p = w1.shape[1]
    O = w2.shape[1]

    # Small-problem fallback: one padded grid step would be pure launch
    # overhead; XLA's fused dot is faster (same bf16-operand / f32-acc math).
    if not force_pallas and B * max(F, H_p, O) < (1 << 16):
        h = jnp.maximum(
            jnp.dot(x.astype(jnp.bfloat16), w1,
                    preferred_element_type=jnp.float32) + b1, 0.0)
        return jnp.dot(h.astype(jnp.bfloat16), w2,
                       preferred_element_type=jnp.float32) + b2

    TB = _pick_tb(B, block_b)
    grid = (pl.cdiv(B, TB),)   # last tile may be partial: OOB reads are inert
    #                            per-row, OOB output rows are masked off.

    # Real VMEM footprint: double-buffered x/out blocks, resident weights
    # (counted double-buffered to be safe), biases, and the f32 h temp.
    vmem_bytes = (2 * TB * F * 4 + 2 * TB * O * 4
                  + 2 * (F * H_p + H_p * O) * 2
                  + 2 * (H_p + O) * 4
                  + TB * H_p * 4)
    vmem_limit = min(64 * 1024 * 1024, max(vmem_bytes * 2, 16 * 1024 * 1024))

    cost = pl.CostEstimate(
        flops=2 * B * (F * H_p + H_p * O),
        transcendentals=0,
        bytes_accessed=B * F * 4 + (F * H_p + H_p * O) * 2
                       + (H_p + O) * 4 + B * O * 4,
    )

    # TODO(synk): if F or H grow into the multi-K range (esp. on v7x with
    #             64 MiB VMEM/TC), add a K-tiling grid axis with a VMEM f32
    #             accumulator + pl.when init/finalize instead of holding the
    #             whole (F,Hp)/(Hp,O) weights resident; on v7x also consider
    #             pipeline_mode=pl.Buffered(3) for the x in_spec.
    return pl.pallas_call(
        _mlp_kernel,
        out_shape=jax.ShapeDtypeStruct((B, O), jnp.float32),
        grid=grid,
        in_specs=[
            pl.BlockSpec((TB, F), lambda i: (i, 0)),     # streamed batch tile (f32)
            pl.BlockSpec((F, H_p), lambda i: (0, 0)),    # resident bf16 weights
            pl.BlockSpec((1, H_p), lambda i: (0, 0)),    # resident f32 bias
            pl.BlockSpec((H_p, O), lambda i: (0, 0)),    # resident bf16 weights
            pl.BlockSpec((1, O), lambda i: (0, 0)),      # resident f32 bias
        ],
        out_specs=pl.BlockSpec((TB, O), lambda i: (i, 0)),
        compiler_params=pltpu.CompilerParams(
            dimension_semantics=("parallel",),
            vmem_limit_bytes=int(vmem_limit),
        ),
        cost_estimate=cost,
    )(x, w1, b1, w2, b2)


def init_params(key, num_features, num_outs, n_hid=128):
    """Deterministic xavier_normal_ weights (bias = 0), matching the module init."""
    k1, k2 = jax.random.split(key)

    def xavier_normal(k, fan_in, fan_out):
        std = jnp.sqrt(2.0 / (fan_in + fan_out))
        # PyTorch weight is (out, in); we store the transpose (in, out).
        return (std * jax.random.normal(k, (fan_in, fan_out))).astype(jnp.float32)

    w1 = xavier_normal(k1, num_features, n_hid)
    b1 = jnp.zeros((1, n_hid), jnp.float32)
    w2 = xavier_normal(k2, n_hid, num_outs)
    b2 = jnp.zeros((1, num_outs), jnp.float32)
    return w1, b1, w2, b2


if __name__ == "__main__":
    key = jax.random.PRNGKey(0)
    kx, kp, kx2 = jax.random.split(key, 3)

    batch = 8
    num_features = 32
    n_hid = 128
    num_outs = 16

    w1, b1, w2, b2 = init_params(kp, num_features, num_outs, n_hid)
    params = prepare_params(w1, b1, w2, b2)   # one-time pad + bf16 cast

    def ref_bf16(xv):
        h = jnp.maximum(
            jnp.dot(xv.astype(jnp.bfloat16), w1.astype(jnp.bfloat16),
                    preferred_element_type=jnp.float32) + b1, 0.0)
        return jnp.dot(h.astype(jnp.bfloat16), w2.astype(jnp.bfloat16),
                       preferred_element_type=jnp.float32) + b2

    # 1) Tiny batch: force the Pallas path (single grid step) and also check
    #    the auto small-problem fallback gives the same result.
    x_small = jax.random.normal(kx, (batch, num_features), dtype=jnp.float32)
    out_k = jax.block_until_ready(mlp_forward(x_small, params, force_pallas=True))
    out_f = jax.block_until_ready(mlp_forward(x_small, params))
    assert out_k.shape == (batch, num_outs)
    assert jnp.allclose(out_k, ref_bf16(x_small), atol=1e-4, rtol=1e-4)
    assert jnp.allclose(out_f, ref_bf16(x_small), atol=1e-4, rtol=1e-4)

    # 2) Ragged batch + multi-step grid: exercises the masked partial last tile.
    x_big = jax.random.normal(kx2, (300, num_features), dtype=jnp.float32)
    out_b = jax.block_until_ready(
        mlp_forward(x_big, params, block_b=128, force_pallas=True))
    assert out_b.shape == (300, num_outs)
    assert jnp.allclose(out_b, ref_bf16(x_big), atol=1e-4, rtol=1e-4)

    # Sanity vs full-f32 math (bf16 operands introduce ~1e-2-level error).
    ref_f32 = jnp.maximum(x_small @ w1 + b1, 0.0) @ w2 + b2
    assert jnp.allclose(out_k, ref_f32, atol=5e-2, rtol=5e-2)

    print("KERNEL_OK")
</pallas_src>

<mosaic_0001>
module attributes {stable_mosaic.version = 11 : i64} {
  func.func @_mlp_kernel(%arg0: i32, %arg1: memref<8x32xf32, #tpu.memory_space<vmem>>, %arg2: memref<32x128xbf16, #tpu.memory_space<vmem>>, %arg3: memref<1x128xf32, #tpu.memory_space<vmem>>, %arg4: memref<128x16xbf16, #tpu.memory_space<vmem>>, %arg5: memref<1x16xf32, #tpu.memory_space<vmem>>, %arg6: memref<8x16xf32, #tpu.memory_space<vmem>>) attributes {dimension_semantics = [#tpu.dimension_semantics<parallel>], iteration_bounds = array<i64: 1>, scalar_prefetch = 0 : i64, scratch_operands = 0 : i64, tpu.core_type = #tpu.core_type<tc>, window_params = [{transform_indices = @transform_0, window_bounds = array<i64: 8, 32>}, {pipeline_mode = #tpu.pipeline_mode<synchronous>, transform_indices = @transform_1, window_bounds = array<i64: 32, 128>}, {pipeline_mode = #tpu.pipeline_mode<synchronous>, transform_indices = @transform_2, window_bounds = array<i64: 1, 128>}, {pipeline_mode = #tpu.pipeline_mode<synchronous>, transform_indices = @transform_3, window_bounds = array<i64: 128, 16>}, {pipeline_mode = #tpu.pipeline_mode<synchronous>, transform_indices = @transform_4, window_bounds = array<i64: 1, 16>}, {transform_indices = @transform_5, window_bounds = array<i64: 8, 16>}]} {
    %c0 = arith.constant 0 : index
    %c0_0 = arith.constant 0 : index
    %0 = vector.load %arg1[%c0, %c0_0] : memref<8x32xf32, #tpu.memory_space<vmem>>, vector<8x32xf32>
    %1 = arith.truncf %0 : vector<8x32xf32> to vector<8x32xbf16>
    %c0_1 = arith.constant 0 : index
    %c0_2 = arith.constant 0 : index
    %2 = vector.load %arg2[%c0_1, %c0_2] : memref<32x128xbf16, #tpu.memory_space<vmem>>, vector<32x128xbf16>
    %cst = arith.constant dense<0.000000e+00> : vector<8x128xf32>
    %3 = tpu.matmul %1, %2, %cst {dimension_numbers = #tpu.dot_dimension_numbers<[1], [0], [0], [1], [0, 0, 1, 1], [], []>} : vector<8x32xbf16>, vector<32x128xbf16>, vector<8x128xf32> -> vector<8x128xf32>
    %c0_3 = arith.constant 0 : index
    %c0_4 = arith.constant 0 : index
    %4 = vector.load %arg3[%c0_3, %c0_4] : memref<1x128xf32, #tpu.memory_space<vmem>>, vector<1x128xf32>
    %5 = vector.broadcast %4 : vector<1x128xf32> to vector<8x128xf32>
    %6 = arith.addf %3, %5 : vector<8x128xf32>
    %cst_5 = arith.constant 0.000000e+00 : f32
    %7 = vector.broadcast %cst_5 : f32 to vector<8x128xf32>
    %8 = arith.maximumf %6, %7 : vector<8x128xf32>
    %9 = arith.truncf %8 : vector<8x128xf32> to vector<8x128xbf16>
    %c0_6 = arith.constant 0 : index
    %c0_7 = arith.constant 0 : index
    %10 = vector.load %arg4[%c0_6, %c0_7] : memref<128x16xbf16, #tpu.memory_space<vmem>>, vector<128x16xbf16>
    %cst_8 = arith.constant dense<0.000000e+00> : vector<8x16xf32>
    %11 = tpu.matmul %9, %10, %cst_8 {dimension_numbers = #tpu.dot_dimension_numbers<[1], [0], [0], [1], [0, 0, 1, 1], [], []>} : vector<8x128xbf16>, vector<128x16xbf16>, vector<8x16xf32> -> vector<8x16xf32>
    %c0_9 = arith.constant 0 : index
    %c0_10 = arith.constant 0 : index
    %12 = vector.load %arg5[%c0_9, %c0_10] : memref<1x16xf32, #tpu.memory_space<vmem>>, vector<1x16xf32>
    %13 = vector.broadcast %12 : vector<1x16xf32> to vector<8x16xf32>
    %14 = arith.addf %11, %13 : vector<8x16xf32>
    %c0_11 = arith.constant 0 : index
    %c0_12 = arith.constant 0 : index
    %15 = vector.load %arg6[%c0_11, %c0_12] : memref<8x16xf32, #tpu.memory_space<vmem>>, vector<8x16xf32>
    tpu.vector_store %arg6[%c0_11, %c0_12], %14 {strides = array<i32>} : memref<8x16xf32, #tpu.memory_space<vmem>>, vector<8x16xf32>,
    return
  }
  func.func @transform_0(%arg0: i32) -> (i32, i32) {
    %c0_i32 = arith.constant 0 : i32
    %c0_i32_0 = arith.constant 0 : i32
    return %arg0, %c0_i32 : i32, i32
  }
  func.func @transform_1(%arg0: i32) -> (i32, i32) {
    %c0_i32 = arith.constant 0 : i32
    %c0_i32_0 = arith.constant 0 : i32
    %c0_i32_1 = arith.constant 0 : i32
    return %c0_i32, %c0_i32_0 : i32, i32
  }
  func.func @transform_2(%arg0: i32) -> (i32, i32) {
    %c0_i32 = arith.constant 0 : i32
    %c0_i32_0 = arith.constant 0 : i32
    %c0_i32_1 = arith.constant 0 : i32
    return %c0_i32, %c0_i32_0 : i32, i32
  }
  func.func @transform_3(%arg0: i32) -> (i32, i32) {
    %c0_i32 = arith.constant 0 : i32
    %c0_i32_0 = arith.constant 0 : i32
    %c0_i32_1 = arith.constant 0 : i32
    return %c0_i32, %c0_i32_0 : i32, i32
  }
  func.func @transform_4(%arg0: i32) -> (i32, i32) {
    %c0_i32 = arith.constant 0 : i32
    %c0_i32_0 = arith.constant 0 : i32
    %c0_i32_1 = arith.constant 0 : i32
    return %c0_i32, %c0_i32_0 : i32, i32
  }
  func.func @transform_5(%arg0: i32) -> (i32, i32) {
    %c0_i32 = arith.constant 0 : i32
    %c0_i32_0 = arith.constant 0 : i32
    return %arg0, %c0_i32 : i32, i32
  }
}

</mosaic_0001>

<llo_original>
// kernel: tpu_custom_call.1
$region0: #{tpu_custom_call.1}
  #allocation0 [shape = 'u32[]', space=smem, size = 0x4, offset = 0x4, fixed_abs, tag = 'smem constant byte address 0x4 - core index']
  #allocation1 [shape = 'u32[144,128]{1,0:T(1,128)}', space=vmem, size = 0x12000, scoped, tag = 'internal scratch']
  %s0 = inlined_call_operand.vmem [shape: f32[8,32], index: 0, kind: input, shape index: {}]
  %s1 = inlined_call_operand.vmem [shape: bf16[32,128], index: 1, kind: input, shape index: {}]
  %s2 = inlined_call_operand.vmem [shape: f32[1,128], index: 2, kind: input, shape index: {}]
  %s3 = inlined_call_operand.vmem [shape: bf16[128,16], index: 3, kind: input, shape index: {}]
  %s4 = inlined_call_operand.vmem [shape: f32[1,16], index: 4, kind: input, shape index: {}]
  %s5 = inlined_call_operand.hbm [shape: f32[8,16], index: 5, kind: output, shape index: {}]
  %s6 = sld [smem:[#allocation0]]
  $region30: #{tpu_custom_call.1} parent=0
    _
  %s8 = ssub.s32 1, %s6
  %s9 = scalar_select 0, %s8, %s6
  $region1: #{tpu_custom_call.1} parent=0
    #allocation2 [shape = 'u8[4096]{0}', space=vmem, size = 0x1000, scoped, tag = 'output window, operand 0, single buffered']
    #allocation3 [shape = 's32[1]{0}', space=sflag, size = 0x4, scoped, tag = 'scoped memory for tpu_custom_call.1']
    %10 = vsyncpa [#allocation3], 0
    // Predicated region
    $region2: #{tpu_custom_call.1} parent=1 // pred_check
      _
    $region3: #{tpu_custom_call.1} parent=1 // pred_check_branch
      %12 = sbr.rel (0) target = $region5
    $region4: #{tpu_custom_call.1} parent=1 // pred_region
      _
    $region5: #{tpu_custom_call.1} parent=1 // pred_fallthru
      _
    // Predicated region
    $region6: #{tpu_custom_call.1} parent=1 // pred_check
      _
    $region7: #{tpu_custom_call.1} parent=1 // pred_check_branch
      %14 = sbr.rel (0) target = $region9
    $region8: #{tpu_custom_call.1} parent=1 // pred_region
      _
    $region9: #{tpu_custom_call.1} parent=1 // pred_fallthru
      _
    // Predicated region
    $region10: #{tpu_custom_call.1} parent=1 // pred_check
      _
    $region11: #{tpu_custom_call.1} parent=1 // pred_check_branch
      %16 = sbr.rel (0) target = $region13
    $region12: #{tpu_custom_call.1} parent=1 // pred_region
      _
    $region13: #{tpu_custom_call.1} parent=1 // pred_fallthru
      _
    // Predicated region
    $region14: #{tpu_custom_call.1} parent=1 // pred_check
      _
    $region15: #{tpu_custom_call.1} parent=1 // pred_check_branch
      %18 = sbr.rel (0) target = $region17
    $region16: #{tpu_custom_call.1} parent=1 // pred_region
      _
    $region17: #{tpu_custom_call.1} parent=1 // pred_fallthru
      _
    // Predicated region
    $region18: #{tpu_custom_call.1} parent=1 // pred_check
      _
    $region19: #{tpu_custom_call.1} parent=1 // pred_check_branch
      %20 = sbr.rel (0) target = $region21
    $region20: #{tpu_custom_call.1} parent=1 // pred_region
      _
    $region21: #{tpu_custom_call.1} parent=1 // pred_fallthru
      _
    %v22 = vld [vmem:[%s0] sm:$0xff]
    %v23 = vpack.c.bf16 %v22, %v22
    %v24 = vld [vmem:[%s1] sm:$0xf]
    %v25 = vld [vmem:[%s1 + $0x4] sm:$0xf]
    %v26 = vld [vmem:[%s1 + $0x8] sm:$0xf]
    %v27 = vld [vmem:[%s1 + $0xc] sm:$0xf]
    %v28 = vld [vmem:[%s2] sm:$0x1]
    %v30 = vlaneseq
    %v31 = vshrl.u32 %v30, 7
    %v32 = vsub.s32 0, %v31
    %v33 = vrot.slane %v28, %v32
    %v39 = vunpack.c.l.b16 %v24
    %v40 = vunpack.c.l.b16 %v25
    %v41 = vunpack.c.l.b16 %v26
    %v42 = vunpack.c.l.b16 %v27
    %v43 = vpack.c.b16 %v40, %v39
    %v44 = vpack.c.b16 %v42, %v41
    %vm47 = vcmask 261120
    %v49 = vsel %vm47, %v23, 0
    %51 = vmatprep.subr.bf16.mxu0 0
    %52 = vmatpush1.bf16.msra.mxu0 %v43
    %53 = vmatprep.subr.bf16.mxu0 0
    %54 = vmatpush1.bf16.msra.mxu0 %v44
    %55 = vmatprep.subr.bf16.mxu0 0
    %56 = vmatpush1.bf16.msra.mxu0 0
    %57 = vmatprep.subr.bf16.mxu0 0
    %58 = vmatpush1.bf16.msra.mxu0 0
    %59 = vmatprep.subr.bf16.mxu0 0
    %60 = vmatpush1.bf16.msra.mxu0 0
    %61 = vmatprep.subr.bf16.mxu0 0
    %62 = vmatpush1.bf16.msra.mxu0 0
    %63 = vmatprep.subr.bf16.mxu0 0
    %64 = vmatpush1.bf16.msra.mxu0 0
    %65 = vmatprep.subr.bf16.mxu0 0
    %66 = vmatpush1.bf16.msra.mxu0 0
    %67 = vmatprep.subr.bf16.mxu0 0
    %68 = vmatpush1.bf16.msra.mxu0 0
    %69 = vmatprep.subr.bf16.mxu0 0
    %70 = vmatpush1.bf16.msra.mxu0 0
    %71 = vmatprep.subr.bf16.mxu0 0
    %72 = vmatpush1.bf16.msra.mxu0 0
    %73 = vmatprep.subr.bf16.mxu0 0
    %74 = vmatpush1.bf16.msra.mxu0 0
    %75 = vmatprep.subr.bf16.mxu0 0
    %76 = vmatpush1.bf16.msra.mxu0 0
    %77 = vmatprep.subr.bf16.mxu0 0
    %78 = vmatpush1.bf16.msra.mxu0 0
    %79 = vmatprep.subr.bf16.mxu0 0
    %80 = vmatpush1.bf16.msra.mxu0 0
    %81 = vmatprep.subr.bf16.mxu0 0
    %82 = vmatpush1.bf16.msra.mxu0 0
    %83 = vmatprep.mubr.bf16.mxu0 0
    %84 = vmatmul.mubr.bf16.gmra.mrb[0].mxu0 %v49
    %v85 = vpop.f32.mrb[0].mxu0
    %v86 = vadd.f32 %v33, %v85
    %v87 = vpop.f32.mrb[0].mxu0
    %v88 = vpop.f32.mrb[0].mxu0
    %v89 = vpop.f32.mrb[0].mxu0
    %90 = vdwg.mxu0
    %v91 = vmax.f32 %v86, 0.0
    %v92 = vpack.c.bf16 %v91, %v91
    %v93 = vld [vmem:[%s3] sm:$0xf]
    %v94 = vld [vmem:[%s3 + $0x4] sm:$0xf]
    %v95 = vld [vmem:[%s3 + $0x8] sm:$0xf]
    %v96 = vld [vmem:[%s3 + $0xc] sm:$0xf]
    %v97 = vld [vmem:[%s3 + $0x10] sm:$0xf]
    %v98 = vld [vmem:[%s3 + $0x14] sm:$0xf]
    %v99 = vld [vmem:[%s3 + $0x18] sm:$0xf]
    %v100 = vld [vmem:[%s3 + $0x1c] sm:$0xf]
    %v101 = vld [vmem:[%s3 + $0x20] sm:$0xf]
    %v102 = vld [vmem:[%s3 + $0x24] sm:$0xf]
    %v103 = vld [vmem:[%s3 + $0x28] sm:$0xf]
    %v104 = vld [vmem:[%s3 + $0x2c] sm:$0xf]
    %v105 = vld [vmem:[%s3 + $0x30] sm:$0xf]
    %v106 = vld [vmem:[%s3 + $0x34] sm:$0xf]
    %v107 = vld [vmem:[%s3 + $0x38] sm:$0xf]
    %v108 = vld [vmem:[%s3 + $0x3c] sm:$0xf]
    %v109 = vld [vmem:[%s4] sm:$0x1]
    %v111 = vlaneseq
    %v112 = vshrl.u32 %v111, 7
    %v113 = vsub.s32 0, %v112
    %v114 = vrot.slane %v109, %v113
    %v132 = vunpack.c.l.b16 %v93
    %v133 = vunpack.c.l.b16 %v94
    %v134 = vunpack.c.l.b16 %v95
    %v135 = vunpack.c.l.b16 %v96
    %v136 = vunpack.c.l.b16 %v97
    %v137 = vunpack.c.l.b16 %v98
    %v138 = vunpack.c.l.b16 %v99
    %v139 = vunpack.c.l.b16 %v100
    %v140 = vunpack.c.l.b16 %v101
    %v141 = vunpack.c.l.b16 %v102
    %v142 = vunpack.c.l.b16 %v103
    %v143 = vunpack.c.l.b16 %v104
    %v144 = vunpack.c.l.b16 %v105
    %v145 = vunpack.c.l.b16 %v106
    %v146 = vunpack.c.l.b16 %v107
    %v147 = vunpack.c.l.b16 %v108
    %v148 = vpack.c.b16 %v133, %v132
    %v149 = vpack.c.b16 %v135, %v134
    %v150 = vpack.c.b16 %v137, %v136
    %v151 = vpack.c.b16 %v139, %v138
    %v152 = vpack.c.b16 %v141, %v140
    %v153 = vpack.c.b16 %v143, %v142
    %v154 = vpack.c.b16 %v145, %v144
    %v155 = vpack.c.b16 %v147, %v146
    %164 = vmatprep.subr.bf16.mxu0 0
    %165 = vmatpush1.bf16.msra.mxu0 %v148
    %166 = vmatprep.subr.bf16.mxu0 0
    %167 = vmatpush1.bf16.msra.mxu0 %v149
    %168 = vmatprep.subr.bf16.mxu0 0
    %169 = vmatpush1.bf16.msra.mxu0 %v150
    %170 = vmatprep.subr.bf16.mxu0 0
    %171 = vmatpush1.bf16.msra.mxu0 %v151
    %172 = vmatprep.subr.bf16.mxu0 0
    %173 = vmatpush1.bf16.msra.mxu0 %v152
    %174 = vmatprep.subr.bf16.mxu0 0
    %175 = vmatpush1.bf16.msra.mxu0 %v153
    %176 = vmatprep.subr.bf16.mxu0 0
    %177 = vmatpush1.bf16.msra.mxu0 %v154
    %178 = vmatprep.subr.bf16.mxu0 0
    %179 = vmatpush1.bf16.msra.mxu0 %v155
    %180 = vmatprep.subr.bf16.mxu0 0
    %181 = vmatpush1.bf16.msra.mxu0 0
    %182 = vmatprep.subr.bf16.mxu0 0
    %183 = vmatpush1.bf16.msra.mxu0 0
    %184 = vmatprep.subr.bf16.mxu0 0
    %185 = vmatpush1.bf16.msra.mxu0 0
    %186 = vmatprep.subr.bf16.mxu0 0
    %187 = vmatpush1.bf16.msra.mxu0 0
    %188 = vmatprep.subr.bf16.mxu0 0
    %189 = vmatpush1.bf16.msra.mxu0 0
    %190 = vmatprep.subr.bf16.mxu0 0
    %191 = vmatpush1.bf16.msra.mxu0 0
    %192 = vmatprep.subr.bf16.mxu0 0
    %193 = vmatpush1.bf16.msra.mxu0 0
    %194 = vmatprep.subr.bf16.mxu0 0
    %195 = vmatpush1.bf16.msra.mxu0 0
    %196 = vmatprep.mubr.bf16.mxu0 0
    %197 = vmatmul.mubr.bf16.gmra.mrb[0].mxu0 %v92
    %v198 = vpop.f32.mrb[0].mxu0
    %v199 = vadd.f32 %v114, %v198
    %v200 = vpop.f32.mrb[0].mxu0
    %v201 = vpop.f32.mrb[0].mxu0
    %v202 = vpop.f32.mrb[0].mxu0
    %203 = vdwg.mxu0
    %vm204 = vcmask 130048
    %205 = vst.msk [vmem:[#allocation2] sm:$0xff] %vm204, %v199
    // Predicated region
    $region22: #{tpu_custom_call.1} parent=1 // pred_check
      _
    $region23: #{tpu_custom_call.1} parent=1 // pred_check_branch
      %207 = sbr.rel (0) target = $region25
    $region24: #{tpu_custom_call.1} parent=1 // pred_region
      %s209 = ssub.s32 128, 128
      %210 = vsyncadd [#allocation3], %s209
      %s212 = sshll.u32 [#allocation2], 4
      %s213 = int_to_ptr.vmem [resolvable:$true] %s212
      %215 = dma.vmem_to_hbm [thread:$0]  %s213, 128, %s5, [#allocation3]
    $region25: #{tpu_custom_call.1} parent=1 // pred_fallthru
      _
    // Predicated region
    $region26: #{tpu_custom_call.1} parent=1 // pred_check
      _
    $region27: #{tpu_custom_call.1} parent=1 // pred_check_branch
      %217 = sbr.rel (0) target = $region29
    $region28: #{tpu_custom_call.1} parent=1 // pred_region
      %218 = dma.done [#allocation3], 128
    $region29: #{tpu_custom_call.1} parent=1 // pred_fallthru
      _
    %219 = vsyncpa [#allocation3], 1

</llo_original>
